<compile_context>
chip_gen: v6e
topology: v6e:2x2x1
jax: 0.10.0
libtpu: 0.0.40
codegen_flags: <defaults>
</compile_context>

<pallas_src>
import jax
import jax.numpy as jnp
from jax.experimental import pallas as pl
from jax.experimental.pallas import tpu as pltpu

IN_DIM = 512
HIDDEN = 200
HIDDEN_PADDED = 256   # next multiple of 128
OUT_DIM = 2


def mlp_kernel(x_ref, w1_ref, b1_ref, w2_ref, b2_ref, o_ref):
    # dense_layer: x @ W1 + b1  (MXU, f32 accumulation), then ReLU on the VPU.
    h = jnp.dot(x_ref[...], w1_ref[...], preferred_element_type=jnp.float32)
    h = jnp.maximum(h + b1_ref[...], 0.0)
    # prediction_layer: h @ W2 + b2.  Cast activations back to the weight dtype
    # so the second matmul also runs at bf16 MXU rate; accumulation stays f32.
    out = jnp.dot(h.astype(w2_ref.dtype), w2_ref[...],
                  preferred_element_type=jnp.float32)
    out = out + b2_ref[...]
    o_ref[...] = out.astype(o_ref.dtype)


def _round_up(x, m):
    return ((x + m - 1) // m) * m


def _batch_tile_config():
    """Per-generation (batch_tile, vmem_limit_bytes, split_across_cores)."""
    kind = jax.devices()[0].device_kind.lower()
    if "v5" in kind:
        # 128 MiB physical VMEM; working set at 4096 is ~18-20 MiB.
        return 4096, 48 * 1024 * 1024, False
    if "v6" in kind:
        # ~37 MiB working set at 8192 (x 16 MiB double-buffered, h f32 8 MiB,
        # h bf16 4 MiB, lane-padded bf16 out buffers ~4 MiB).  Single TC, so
        # "parallel" is a no-op here (harmless).
        return 8192, 64 * 1024 * 1024, False
    if "v7" in kind:
        # 64 MiB physical VMEM; ~35-40 MiB working set at 8192 -> 48 MiB limit
        # leaves headroom.  Two TensorCores -> force >=2 grid steps.
        return 8192, 48 * 1024 * 1024, True
    # Unknown device (incl. CPU/interpret): conservative.
    return 2048, 32 * 1024 * 1024, False


def my_network_forward(x, w1, b1, w2, b2, *, block_b=None, out_dtype=jnp.float32):
    """x: [B, 512]; w1: [512, Hp]; b1: [1, Hp]; w2: [Hp, 2]; b2: [1, 2].

    Weights are pre-transposed to [in, out] (hidden pre-padded to Hp=256) so
    the kernel computes x @ W + b directly on the MXU.  The kernel emits bf16;
    the wrapper upcasts to `out_dtype`.
    """
    B = x.shape[0]
    Hp = w1.shape[1]

    tile_b, vmem_limit, split_cores = _batch_tile_config()
    if block_b is None:
        block_b = tile_b
    if split_cores and B > 256:
        # Guarantee >= 2 grid steps so both v7x TensorCores get work.
        block_b = min(block_b, _round_up(pl.cdiv(B, 2), 256))
    block_b = min(block_b, B)
    if block_b != B:
        # Keep the sublane dim a multiple of 8 (BlockSpec (8,128) constraint).
        block_b = max(8, (block_b // 8) * 8)
    grid = (pl.cdiv(B, block_b),)

    out_bf16 = pl.pallas_call(
        mlp_kernel,
        out_shape=jax.ShapeDtypeStruct((B, OUT_DIM), jnp.bfloat16),
        grid_spec=pltpu.PrefetchScalarGridSpec(
            num_scalar_prefetch=0,
            grid=grid,
            in_specs=[
                pl.BlockSpec((block_b, IN_DIM), lambda i: (i, 0)),  # x: streamed
                pl.BlockSpec((IN_DIM, Hp), lambda i: (0, 0)),       # w1: resident
                pl.BlockSpec((1, Hp), lambda i: (0, 0)),            # b1: resident
                pl.BlockSpec((Hp, OUT_DIM), lambda i: (0, 0)),      # w2: resident
                pl.BlockSpec((1, OUT_DIM), lambda i: (0, 0)),       # b2: resident
            ],
            out_specs=pl.BlockSpec((block_b, OUT_DIM), lambda i: (i, 0)),
        ),
        compiler_params=pltpu.CompilerParams(
            dimension_semantics=("parallel",),
            vmem_limit_bytes=vmem_limit,
        ),
    )(x, w1, b1, w2, b2)

    if out_dtype == jnp.bfloat16:
        return out_bf16
    return out_bf16.astype(out_dtype)


def init_params(key):
    """Init mirroring nn.Linear's uniform(-1/sqrt(fan_in), 1/sqrt(fan_in)),
    stored already transposed to [in, out] for the kernel."""
    k1, k2, k3, k4 = jax.random.split(key, 4)
    bound1 = 1.0 / jnp.sqrt(IN_DIM)
    bound2 = 1.0 / jnp.sqrt(HIDDEN)
    w1 = jax.random.uniform(k1, (IN_DIM, HIDDEN), jnp.float32, -bound1, bound1)
    b1 = jax.random.uniform(k2, (1, HIDDEN), jnp.float32, -bound1, bound1)
    w2 = jax.random.uniform(k3, (HIDDEN, OUT_DIM), jnp.float32, -bound2, bound2)
    b2 = jax.random.uniform(k4, (1, OUT_DIM), jnp.float32, -bound2, bound2)
    return w1, b1, w2, b2


def pad_hidden(w1, b1, w2):
    """Zero-pad the hidden dim 200 -> 256 (lane-dense layout; math unchanged)."""
    pad = HIDDEN_PADDED - HIDDEN
    w1p = jnp.pad(w1, ((0, 0), (0, pad)))
    b1p = jnp.pad(b1, ((0, 0), (0, pad)))
    w2p = jnp.pad(w2, ((0, pad), (0, 0)))
    return w1p, b1p, w2p


if __name__ == "__main__":
    key = jax.random.PRNGKey(0)
    kx, kp = jax.random.split(key)

    B = 8
    x_f32 = jax.random.normal(kx, (B, IN_DIM), jnp.float32)
    w1, b1, w2, b2 = init_params(kp)

    # Pad hidden dim and cast weights / activations to bf16 (biases stay f32).
    # Note: bf16 inputs/weights differ from a pure-f32 nn.Module by ~1e-2 rel.
    w1p, b1p, w2p = pad_hidden(w1, b1, w2)
    x_bf16 = x_f32.astype(jnp.bfloat16)
    w1_bf16 = w1p.astype(jnp.bfloat16)
    w2_bf16 = w2p.astype(jnp.bfloat16)

    out = my_network_forward(x_bf16, w1_bf16, b1p, w2_bf16, b2,
                             out_dtype=jnp.float32)
    out = jax.block_until_ready(out)

    # Reference in plain JAX mirroring the kernel's dtype path
    # (bf16 inputs/weights, f32 accumulation, bf16 hidden acts, bf16 output).
    xr = x_bf16.astype(jnp.float32)
    w1r = w1_bf16.astype(jnp.float32)
    w2r = w2_bf16.astype(jnp.float32)
    h_ref = jnp.maximum(xr @ w1r + b1p, 0.0)
    ref_f32 = h_ref.astype(jnp.bfloat16).astype(jnp.float32) @ w2r + b2
    ref = ref_f32.astype(jnp.bfloat16).astype(jnp.float32)

    assert out.shape == (B, OUT_DIM)
    assert jnp.allclose(out, ref, atol=2e-2, rtol=2e-2)

    print("KERNEL_OK")
</pallas_src>

<mosaic_0001>
module attributes {stable_mosaic.version = 11 : i64} {
  func.func @mlp_kernel(%arg0: i32, %arg1: memref<8x512xbf16, #tpu.memory_space<vmem>>, %arg2: memref<512x256xbf16, #tpu.memory_space<vmem>>, %arg3: memref<1x256xf32, #tpu.memory_space<vmem>>, %arg4: memref<256x2xbf16, #tpu.memory_space<vmem>>, %arg5: memref<1x2xf32, #tpu.memory_space<vmem>>, %arg6: memref<8x2xbf16, #tpu.memory_space<vmem>>) attributes {dimension_semantics = [#tpu.dimension_semantics<parallel>], iteration_bounds = array<i64: 1>, scalar_prefetch = 0 : i64, scratch_operands = 0 : i64, tpu.core_type = #tpu.core_type<tc>, window_params = [{transform_indices = @transform_0, window_bounds = array<i64: 8, 512>}, {pipeline_mode = #tpu.pipeline_mode<synchronous>, transform_indices = @transform_1, window_bounds = array<i64: 512, 256>}, {pipeline_mode = #tpu.pipeline_mode<synchronous>, transform_indices = @transform_2, window_bounds = array<i64: 1, 256>}, {pipeline_mode = #tpu.pipeline_mode<synchronous>, transform_indices = @transform_3, window_bounds = array<i64: 256, 2>}, {pipeline_mode = #tpu.pipeline_mode<synchronous>, transform_indices = @transform_4, window_bounds = array<i64: 1, 2>}, {transform_indices = @transform_5, window_bounds = array<i64: 8, 2>}]} {
    %c0 = arith.constant 0 : index
    %c0_0 = arith.constant 0 : index
    %0 = vector.load %arg1[%c0, %c0_0] : memref<8x512xbf16, #tpu.memory_space<vmem>>, vector<8x512xbf16>
    %c0_1 = arith.constant 0 : index
    %c0_2 = arith.constant 0 : index
    %1 = vector.load %arg2[%c0_1, %c0_2] : memref<512x256xbf16, #tpu.memory_space<vmem>>, vector<512x256xbf16>
    %cst = arith.constant dense<0.000000e+00> : vector<8x256xf32>
    %2 = tpu.matmul %0, %1, %cst {dimension_numbers = #tpu.dot_dimension_numbers<[1], [0], [0], [1], [0, 0, 1, 1], [], []>} : vector<8x512xbf16>, vector<512x256xbf16>, vector<8x256xf32> -> vector<8x256xf32>
    %c0_3 = arith.constant 0 : index
    %c0_4 = arith.constant 0 : index
    %3 = vector.load %arg3[%c0_3, %c0_4] : memref<1x256xf32, #tpu.memory_space<vmem>>, vector<1x256xf32>
    %4 = vector.broadcast %3 : vector<1x256xf32> to vector<8x256xf32>
    %5 = arith.addf %2, %4 : vector<8x256xf32>
    %cst_5 = arith.constant 0.000000e+00 : f32
    %6 = vector.broadcast %cst_5 : f32 to vector<8x256xf32>
    %7 = arith.maximumf %5, %6 : vector<8x256xf32>
    %8 = arith.truncf %7 : vector<8x256xf32> to vector<8x256xbf16>
    %c0_6 = arith.constant 0 : index
    %c0_7 = arith.constant 0 : index
    %9 = vector.load %arg4[%c0_6, %c0_7] : memref<256x2xbf16, #tpu.memory_space<vmem>>, vector<256x2xbf16>
    %cst_8 = arith.constant dense<0.000000e+00> : vector<8x2xf32>
    %10 = tpu.matmul %8, %9, %cst_8 {dimension_numbers = #tpu.dot_dimension_numbers<[1], [0], [0], [1], [0, 0, 1, 1], [], []>} : vector<8x256xbf16>, vector<256x2xbf16>, vector<8x2xf32> -> vector<8x2xf32>
    %c0_9 = arith.constant 0 : index
    %c0_10 = arith.constant 0 : index
    %11 = vector.load %arg5[%c0_9, %c0_10] : memref<1x2xf32, #tpu.memory_space<vmem>>, vector<1x2xf32>
    %12 = vector.broadcast %11 : vector<1x2xf32> to vector<8x2xf32>
    %13 = arith.addf %10, %12 : vector<8x2xf32>
    %14 = arith.truncf %13 : vector<8x2xf32> to vector<8x2xbf16>
    %c0_11 = arith.constant 0 : index
    %c0_12 = arith.constant 0 : index
    %15 = vector.load %arg6[%c0_11, %c0_12] : memref<8x2xbf16, #tpu.memory_space<vmem>>, vector<8x2xbf16>
    tpu.vector_store %arg6[%c0_11, %c0_12], %14 {strides = array<i32>} : memref<8x2xbf16, #tpu.memory_space<vmem>>, vector<8x2xbf16>,
    return
  }
  func.func @transform_0(%arg0: i32) -> (i32, i32) {
    %c0_i32 = arith.constant 0 : i32
    %c0_i32_0 = arith.constant 0 : i32
    return %arg0, %c0_i32 : i32, i32
  }
  func.func @transform_1(%arg0: i32) -> (i32, i32) {
    %c0_i32 = arith.constant 0 : i32
    %c0_i32_0 = arith.constant 0 : i32
    %c0_i32_1 = arith.constant 0 : i32
    return %c0_i32, %c0_i32_0 : i32, i32
  }
  func.func @transform_2(%arg0: i32) -> (i32, i32) {
    %c0_i32 = arith.constant 0 : i32
    %c0_i32_0 = arith.constant 0 : i32
    %c0_i32_1 = arith.constant 0 : i32
    return %c0_i32, %c0_i32_0 : i32, i32
  }
  func.func @transform_3(%arg0: i32) -> (i32, i32) {
    %c0_i32 = arith.constant 0 : i32
    %c0_i32_0 = arith.constant 0 : i32
    %c0_i32_1 = arith.constant 0 : i32
    return %c0_i32, %c0_i32_0 : i32, i32
  }
  func.func @transform_4(%arg0: i32) -> (i32, i32) {
    %c0_i32 = arith.constant 0 : i32
    %c0_i32_0 = arith.constant 0 : i32
    %c0_i32_1 = arith.constant 0 : i32
    return %c0_i32, %c0_i32_0 : i32, i32
  }
  func.func @transform_5(%arg0: i32) -> (i32, i32) {
    %c0_i32 = arith.constant 0 : i32
    %c0_i32_0 = arith.constant 0 : i32
    return %arg0, %c0_i32 : i32, i32
  }
}

</mosaic_0001>

<llo_original>
// kernel: tpu_custom_call.1
$region0: #{tpu_custom_call.1}
  #allocation0 [shape = 'u32[]', space=smem, size = 0x4, offset = 0x4, fixed_abs, tag = 'smem constant byte address 0x4 - core index']
  #allocation1 [shape = 'u32[144,128]{1,0:T(1,128)}', space=vmem, size = 0x12000, scoped, tag = 'internal scratch']
  %s0 = inlined_call_operand.vmem [shape: bf16[8,512], index: 0, kind: input, shape index: {}]
  %s1 = inlined_call_operand.hbm [shape: bf16[512,256], index: 1, kind: input, shape index: {}]
  %s2 = inlined_call_operand.vmem [shape: f32[1,256], index: 2, kind: input, shape index: {}]
  %s3 = inlined_call_operand.vmem [shape: bf16[256,2], index: 3, kind: input, shape index: {}]
  %s4 = inlined_call_operand.vmem [shape: f32[1,2], index: 4, kind: input, shape index: {}]
  %s5 = inlined_call_operand.vmem [shape: bf16[8,2], index: 5, kind: output, shape index: {}]
  %s6 = sld [smem:[#allocation0]]
  $region34: #{tpu_custom_call.1} parent=0
    _
  %s8 = ssub.s32 1, %s6
  %s9 = scalar_select 0, %s8, %s6
  $region1: #{tpu_custom_call.1} parent=0
    #allocation2 [shape = 'u8[262144]{0}', space=vmem, size = 0x40000, scoped, tag = 'input window, operand 1, single buffered']
    #allocation3 [shape = 's32[1]{0}', space=sflag, size = 0x4, scoped, tag = 'scoped memory for tpu_custom_call.1']
    %10 = vsyncpa [#allocation3], 0
    // Predicated region
    $region2: #{tpu_custom_call.1} parent=1 // pred_check
      _
    $region3: #{tpu_custom_call.1} parent=1 // pred_check_branch
      %12 = sbr.rel (0) target = $region5
    $region4: #{tpu_custom_call.1} parent=1 // pred_region
      _
    $region5: #{tpu_custom_call.1} parent=1 // pred_fallthru
      _
    // Predicated region
    $region6: #{tpu_custom_call.1} parent=1 // pred_check
      _
    $region7: #{tpu_custom_call.1} parent=1 // pred_check_branch
      %14 = sbr.rel (0) target = $region9
    $region8: #{tpu_custom_call.1} parent=1 // pred_region
      %s16 = ssub.s32 8192, 8192
      %17 = vsyncadd [#allocation3], %s16
      %s18 = sshll.u32 [#allocation2], 4
      %s19 = int_to_ptr.vmem [resolvable:$true] %s18
      %24 = dma.hbm_to_vmem [thread:$0]  %s1, 8192, %s19, [#allocation3], 128, 128, 8
    $region9: #{tpu_custom_call.1} parent=1 // pred_fallthru
      _
    // Predicated region
    $region10: #{tpu_custom_call.1} parent=1 // pred_check
      _
    $region11: #{tpu_custom_call.1} parent=1 // pred_check_branch
      %26 = sbr.rel (0) target = $region13
    $region12: #{tpu_custom_call.1} parent=1 // pred_region
      _
    $region13: #{tpu_custom_call.1} parent=1 // pred_fallthru
      _
    // Predicated region
    $region14: #{tpu_custom_call.1} parent=1 // pred_check
      _
    $region15: #{tpu_custom_call.1} parent=1 // pred_check_branch
      %28 = sbr.rel (0) target = $region17
    $region16: #{tpu_custom_call.1} parent=1 // pred_region
      _
    $region17: #{tpu_custom_call.1} parent=1 // pred_fallthru
      _
    // Predicated region
    $region18: #{tpu_custom_call.1} parent=1 // pred_check
      _
    $region19: #{tpu_custom_call.1} parent=1 // pred_check_branch
      %30 = sbr.rel (0) target = $region21
    $region20: #{tpu_custom_call.1} parent=1 // pred_region
      _
    $region21: #{tpu_custom_call.1} parent=1 // pred_fallthru
      _
    // Predicated region
    $region22: #{tpu_custom_call.1} parent=1 // pred_check
      _
    $region23: #{tpu_custom_call.1} parent=1 // pred_check_branch
      %32 = sbr.rel (0) target = $region25
    $region24: #{tpu_custom_call.1} parent=1 // pred_region
      %33 = dma.done [#allocation3], 8192
    $region25: #{tpu_custom_call.1} parent=1 // pred_fallthru
      _
    %v35 = vld [vmem:[%s0] sm:$0xff]
    %v36 = vld [vmem:[%s0 + $0x8] sm:$0xff]
    %v37 = vld [vmem:[#allocation2] sm:$0xff]
    %v38 = vld [vmem:[#allocation2 + $0x8] sm:$0xff]
    %v39 = vld [vmem:[#allocation2 + $0x10] sm:$0xff]
    %v40 = vld [vmem:[#allocation2 + $0x18] sm:$0xff]
    %v41 = vld [vmem:[#allocation2 + $0x20] sm:$0xff]
    %v42 = vld [vmem:[#allocation2 + $0x28] sm:$0xff]
    %v43 = vld [vmem:[#allocation2 + $0x30] sm:$0xff]
    %v44 = vld [vmem:[#allocation2 + $0x38] sm:$0xff]
    %v45 = vld [vmem:[#allocation2 + $0x40] sm:$0xff]
    %v46 = vld [vmem:[#allocation2 + $0x48] sm:$0xff]
    %v47 = vld [vmem:[#allocation2 + $0x50] sm:$0xff]
    %v48 = vld [vmem:[#allocation2 + $0x58] sm:$0xff]
    %v49 = vld [vmem:[#allocation2 + $0x60] sm:$0xff]
    %v50 = vld [vmem:[#allocation2 + $0x68] sm:$0xff]
    %v51 = vld [vmem:[#allocation2 + $0x70] sm:$0xff]
    %v52 = vld [vmem:[#allocation2 + $0x78] sm:$0xff]
    %v53 = vld [vmem:[#allocation2 + $0x80] sm:$0xff]
    %v54 = vld [vmem:[#allocation2 + $0x88] sm:$0xff]
    %v55 = vld [vmem:[#allocation2 + $0x90] sm:$0xff]
    %v56 = vld [vmem:[#allocation2 + $0x98] sm:$0xff]
    %v57 = vld [vmem:[#allocation2 + $0xa0] sm:$0xff]
    %v58 = vld [vmem:[#allocation2 + $0xa8] sm:$0xff]
    %v59 = vld [vmem:[#allocation2 + $0xb0] sm:$0xff]
    %v60 = vld [vmem:[#allocation2 + $0xb8] sm:$0xff]
    %v61 = vld [vmem:[#allocation2 + $0xc0] sm:$0xff]
    %v62 = vld [vmem:[#allocation2 + $0xc8] sm:$0xff]
    %v63 = vld [vmem:[#allocation2 + $0xd0] sm:$0xff]
    %v64 = vld [vmem:[#allocation2 + $0xd8] sm:$0xff]
    %v65 = vld [vmem:[#allocation2 + $0xe0] sm:$0xff]
    %v66 = vld [vmem:[#allocation2 + $0xe8] sm:$0xff]
    %v67 = vld [vmem:[#allocation2 + $0xf0] sm:$0xff]
    %v68 = vld [vmem:[#allocation2 + $0xf8] sm:$0xff]
    %v69 = vld [vmem:[#allocation2 + $0x100] sm:$0xff]
    %v70 = vld [vmem:[#allocation2 + $0x108] sm:$0xff]
    %v71 = vld [vmem:[#allocation2 + $0x110] sm:$0xff]
    %v72 = vld [vmem:[#allocation2 + $0x118] sm:$0xff]
    %v73 = vld [vmem:[#allocation2 + $0x120] sm:$0xff]
    %v74 = vld [vmem:[#allocation2 + $0x128] sm:$0xff]
    %v75 = vld [vmem:[#allocation2 + $0x130] sm:$0xff]
    %v76 = vld [vmem:[#allocation2 + $0x138] sm:$0xff]
    %v77 = vld [vmem:[#allocation2 + $0x140] sm:$0xff]
    %v78 = vld [vmem:[#allocation2 + $0x148] sm:$0xff]
    %v79 = vld [vmem:[#allocation2 + $0x150] sm:$0xff]
    %v80 = vld [vmem:[#allocation2 + $0x158] sm:$0xff]
    %v81 = vld [vmem:[#allocation2 + $0x160] sm:$0xff]
    %v82 = vld [vmem:[#allocation2 + $0x168] sm:$0xff]
    %v83 = vld [vmem:[#allocation2 + $0x170] sm:$0xff]
    %v84 = vld [vmem:[#allocation2 + $0x178] sm:$0xff]
    %v85 = vld [vmem:[#allocation2 + $0x180] sm:$0xff]
    %v86 = vld [vmem:[#allocation2 + $0x188] sm:$0xff]
    %v87 = vld [vmem:[#allocation2 + $0x190] sm:$0xff]
    %v88 = vld [vmem:[#allocation2 + $0x198] sm:$0xff]
    %v89 = vld [vmem:[#allocation2 + $0x1a0] sm:$0xff]
    %v90 = vld [vmem:[#allocation2 + $0x1a8] sm:$0xff]
    %v91 = vld [vmem:[#allocation2 + $0x1b0] sm:$0xff]
    %v92 = vld [vmem:[#allocation2 + $0x1b8] sm:$0xff]
    %v93 = vld [vmem:[#allocation2 + $0x1c0] sm:$0xff]
    %v94 = vld [vmem:[#allocation2 + $0x1c8] sm:$0xff]
    %v95 = vld [vmem:[#allocation2 + $0x1d0] sm:$0xff]
    %v96 = vld [vmem:[#allocation2 + $0x1d8] sm:$0xff]
    %v97 = vld [vmem:[#allocation2 + $0x1e0] sm:$0xff]
    %v98 = vld [vmem:[#allocation2 + $0x1e8] sm:$0xff]
    %v99 = vld [vmem:[#allocation2 + $0x1f0] sm:$0xff]
    %v100 = vld [vmem:[#allocation2 + $0x1f8] sm:$0xff]
    %v101 = vld [vmem:[%s2] sm:$0x3]
    %v103 = vlaneseq
    %v104 = vshrl.u32 %v103, 7
    %v105 = vsub.s32 0, %v104
    %v106 = vrot.slane %v101, %v105
    %v107 = vlaneseq
    %v108 = vshrl.u32 %v107, 7
    %v109 = vsub.s32 1, %v108
    %v110 = vrot.slane %v101, %v109
    %v115 = vunpack.c.l.b16 %v35
    %v116 = vunpack.c.h.b16 %v35
    %v117 = vunpack.c.l.b16 %v36
    %v118 = vunpack.c.h.b16 %v36
    %v119 = vpack.c.b16 %v115, %v115
    %v120 = vpack.c.b16 %v116, %v116
    %v121 = vpack.c.b16 %v117, %v117
    %v122 = vpack.c.b16 %v118, %v118
    %v191 = vunpack.c.l.b16 %v37
    %v192 = vunpack.c.h.b16 %v37
    %v193 = vunpack.c.l.b16 %v38
    %v194 = vunpack.c.h.b16 %v38
    %v195 = vunpack.c.l.b16 %v39
    %v196 = vunpack.c.h.b16 %v39
    %v197 = vunpack.c.l.b16 %v40
    %v198 = vunpack.c.h.b16 %v40
    %v199 = vunpack.c.l.b16 %v41
    %v200 = vunpack.c.h.b16 %v41
    %v201 = vunpack.c.l.b16 %v42
    %v202 = vunpack.c.h.b16 %v42
    %v203 = vunpack.c.l.b16 %v43
    %v204 = vunpack.c.h.b16 %v43
    %v205 = vunpack.c.l.b16 %v44
    %v206 = vunpack.c.h.b16 %v44
    %v207 = vunpack.c.l.b16 %v45
    %v208 = vunpack.c.h.b16 %v45
    %v209 = vunpack.c.l.b16 %v46
    %v210 = vunpack.c.h.b16 %v46
    %v211 = vunpack.c.l.b16 %v47
    %v212 = vunpack.c.h.b16 %v47
    %v213 = vunpack.c.l.b16 %v48
    %v214 = vunpack.c.h.b16 %v48
    %v215 = vunpack.c.l.b16 %v49
    %v216 = vunpack.c.h.b16 %v49
    %v217 = vunpack.c.l.b16 %v50
    %v218 = vunpack.c.h.b16 %v50
    %v219 = vunpack.c.l.b16 %v51
    %v220 = vunpack.c.h.b16 %v51
    %v221 = vunpack.c.l.b16 %v52
    %v222 = vunpack.c.h.b16 %v52
    %v223 = vunpack.c.l.b16 %v53
    %v224 = vunpack.c.h.b16 %v53
    %v225 = vunpack.c.l.b16 %v54
    %v226 = vunpack.c.h.b16 %v54
    %v227 = vunpack.c.l.b16 %v55
    %v228 = vunpack.c.h.b16 %v55
    %v229 = vunpack.c.l.b16 %v56
    %v230 = vunpack.c.h.b16 %v56
    %v231 = vunpack.c.l.b16 %v57
    %v232 = vunpack.c.h.b16 %v57
    %v233 = vunpack.c.l.b16 %v58
    %v234 = vunpack.c.h.b16 %v58
    %v235 = vunpack.c.l.b16 %v59
    %v236 = vunpack.c.h.b16 %v59
    %v237 = vunpack.c.l.b16 %v60
    %v238 = vunpack.c.h.b16 %v60
    %v239 = vunpack.c.l.b16 %v61
    %v240 = vunpack.c.h.b16 %v61
    %v241 = vunpack.c.l.b16 %v62
    %v242 = vunpack.c.h.b16 %v62
    %v243 = vunpack.c.l.b16 %v63
    %v244 = vunpack.c.h.b16 %v63
    %v245 = vunpack.c.l.b16 %v64
    %v246 = vunpack.c.h.b16 %v64
    %v247 = vunpack.c.l.b16 %v65
    %v248 = vunpack.c.h.b16 %v65
    %v249 = vunpack.c.l.b16 %v66
    %v250 = vunpack.c.h.b16 %v66
    %v251 = vunpack.c.l.b16 %v67
    %v252 = vunpack.c.h.b16 %v67
    %v253 = vunpack.c.l.b16 %v68
    %v254 = vunpack.c.h.b16 %v68
    %v255 = vunpack.c.l.b16 %v69
    %v256 = vunpack.c.h.b16 %v69
    %v257 = vunpack.c.l.b16 %v70
    %v258 = vunpack.c.h.b16 %v70
    %v259 = vunpack.c.l.b16 %v71
    %v260 = vunpack.c.h.b16 %v71
    %v261 = vunpack.c.l.b16 %v72
    %v262 = vunpack.c.h.b16 %v72
    %v263 = vunpack.c.l.b16 %v73
    %v264 = vunpack.c.h.b16 %v73
    %v265 = vunpack.c.l.b16 %v74
    %v266 = vunpack.c.h.b16 %v74
    %v267 = vunpack.c.l.b16 %v75
    %v268 = vunpack.c.h.b16 %v75
    %v269 = vunpack.c.l.b16 %v76
    %v270 = vunpack.c.h.b16 %v76
    %v271 = vunpack.c.l.b16 %v77
    %v272 = vunpack.c.h.b16 %v77
    %v273 = vunpack.c.l.b16 %v78
    %v274 = vunpack.c.h.b16 %v78
    %v275 = vunpack.c.l.b16 %v79
    %v276 = vunpack.c.h.b16 %v79
    %v277 = vunpack.c.l.b16 %v80
    %v278 = vunpack.c.h.b16 %v80
    %v279 = vunpack.c.l.b16 %v81
    %v280 = vunpack.c.h.b16 %v81
    %v281 = vunpack.c.l.b16 %v82
    %v282 = vunpack.c.h.b16 %v82
    %v283 = vunpack.c.l.b16 %v83
    %v284 = vunpack.c.h.b16 %v83
    %v285 = vunpack.c.l.b16 %v84
    %v286 = vunpack.c.h.b16 %v84
    %v287 = vunpack.c.l.b16 %v85
    %v288 = vunpack.c.h.b16 %v85
    %v289 = vunpack.c.l.b16 %v86
    %v290 = vunpack.c.h.b16 %v86
    %v291 = vunpack.c.l.b16 %v87
    %v292 = vunpack.c.h.b16 %v87
    %v293 = vunpack.c.l.b16 %v88
    %v294 = vunpack.c.h.b16 %v88
    %v295 = vunpack.c.l.b16 %v89
    %v296 = vunpack.c.h.b16 %v89
    %v297 = vunpack.c.l.b16 %v90
    %v298 = vunpack.c.h.b16 %v90
    %v299 = vunpack.c.l.b16 %v91
    %v300 = vunpack.c.h.b16 %v91
    %v301 = vunpack.c.l.b16 %v92
    %v302 = vunpack.c.h.b16 %v92
    %v303 = vunpack.c.l.b16 %v93
    %v304 = vunpack.c.h.b16 %v93
    %v305 = vunpack.c.l.b16 %v94
    %v306 = vunpack.c.h.b16 %v94
    %v307 = vunpack.c.l.b16 %v95
    %v308 = vunpack.c.h.b16 %v95
    %v309 = vunpack.c.l.b16 %v96
    %v310 = vunpack.c.h.b16 %v96
    %v311 = vunpack.c.l.b16 %v97
    %v312 = vunpack.c.h.b16 %v97
    %v313 = vunpack.c.l.b16 %v98
    %v314 = vunpack.c.h.b16 %v98
    %v315 = vunpack.c.l.b16 %v99
    %v316 = vunpack.c.h.b16 %v99
    %v317 = vunpack.c.l.b16 %v100
    %v318 = vunpack.c.h.b16 %v100
    %v319 = vpack.c.b16 %v193, %v191
    %v320 = vpack.c.b16 %v194, %v192
    %v321 = vpack.c.b16 %v197, %v195
    %v322 = vpack.c.b16 %v198, %v196
    %v323 = vpack.c.b16 %v201, %v199
    %v324 = vpack.c.b16 %v202, %v200
    %v325 = vpack.c.b16 %v205, %v203
    %v326 = vpack.c.b16 %v206, %v204
    %v327 = vpack.c.b16 %v209, %v207
    %v328 = vpack.c.b16 %v210, %v208
    %v329 = vpack.c.b16 %v213, %v211
    %v330 = vpack.c.b16 %v214, %v212
    %v331 = vpack.c.b16 %v217, %v215
    %v332 = vpack.c.b16 %v218, %v216
    %v333 = vpack.c.b16 %v221, %v219
    %v334 = vpack.c.b16 %v222, %v220
    %v335 = vpack.c.b16 %v225, %v223
    %v336 = vpack.c.b16 %v226, %v224
    %v337 = vpack.c.b16 %v229, %v227
    %v338 = vpack.c.b16 %v230, %v228
    %v339 = vpack.c.b16 %v233, %v231
    %v340 = vpack.c.b16 %v234, %v232
    %v341 = vpack.c.b16 %v237, %v235
    %v342 = vpack.c.b16 %v238, %v236
    %v343 = vpack.c.b16 %v241, %v239
    %v344 = vpack.c.b16 %v242, %v240
    %v345 = vpack.c.b16 %v245, %v243
    %v346 = vpack.c.b16 %v246, %v244
    %v347 = vpack.c.b16 %v249, %v247
    %v348 = vpack.c.b16 %v250, %v248
    %v349 = vpack.c.b16 %v253, %v251
    %v350 = vpack.c.b16 %v254, %v252
    %v351 = vpack.c.b16 %v257, %v255
    %v352 = vpack.c.b16 %v258, %v256
    %v353 = vpack.c.b16 %v261, %v259
    %v354 = vpack.c.b16 %v262, %v260
    %v355 = vpack.c.b16 %v265, %v263
    %v356 = vpack.c.b16 %v266, %v264
    %v357 = vpack.c.b16 %v269, %v267
    %v358 = vpack.c.b16 %v270, %v268
    %v359 = vpack.c.b16 %v273, %v271
    %v360 = vpack.c.b16 %v274, %v272
    %v361 = vpack.c.b16 %v277, %v275
    %v362 = vpack.c.b16 %v278, %v276
    %v363 = vpack.c.b16 %v281, %v279
    %v364 = vpack.c.b16 %v282, %v280
    %v365 = vpack.c.b16 %v285, %v283
    %v366 = vpack.c.b16 %v286, %v284
    %v367 = vpack.c.b16 %v289, %v287
    %v368 = vpack.c.b16 %v290, %v288
    %v369 = vpack.c.b16 %v293, %v291
    %v370 = vpack.c.b16 %v294, %v292
    %v371 = vpack.c.b16 %v297, %v295
    %v372 = vpack.c.b16 %v298, %v296
    %v373 = vpack.c.b16 %v301, %v299
    %v374 = vpack.c.b16 %v302, %v300
    %v375 = vpack.c.b16 %v305, %v303
    %v376 = vpack.c.b16 %v306, %v304
    %v377 = vpack.c.b16 %v309, %v307
    %v378 = vpack.c.b16 %v310, %v308
    %v379 = vpack.c.b16 %v313, %v311
    %v380 = vpack.c.b16 %v314, %v312
    %v381 = vpack.c.b16 %v317, %v315
    %v382 = vpack.c.b16 %v318, %v316
    %447 = vmatprep.subr.bf16.mxu0 %v334
    %448 = vmatpush1.bf16.msra.mxu0 %v333
    %449 = vmatprep.subr.bf16.mxu0 %v332
    %450 = vmatpush1.bf16.msra.mxu0 %v331
    %451 = vmatprep.subr.bf16.mxu0 %v330
    %452 = vmatpush1.bf16.msra.mxu0 %v329
    %453 = vmatprep.subr.bf16.mxu0 %v328
    %454 = vmatpush1.bf16.msra.mxu0 %v327
    %455 = vmatprep.subr.bf16.mxu0 %v326
    %456 = vmatpush1.bf16.msra.mxu0 %v325
    %457 = vmatprep.subr.bf16.mxu0 %v324
    %458 = vmatpush1.bf16.msra.mxu0 %v323
    %459 = vmatprep.subr.bf16.mxu0 %v322
    %460 = vmatpush1.bf16.msra.mxu0 %v321
    %461 = vmatprep.subr.bf16.mxu0 %v320
    %462 = vmatpush1.bf16.msra.mxu0 %v319
    %463 = vmatprep.subr.bf16.mxu0 %v350
    %464 = vmatpush2.bf16.msra.mxu0 %v349
    %465 = vmatprep.subr.bf16.mxu0 %v348
    %466 = vmatpush2.bf16.msra.mxu0 %v347
    %467 = vmatprep.subr.bf16.mxu0 %v346
    %468 = vmatpush2.bf16.msra.mxu0 %v345
    %469 = vmatprep.subr.bf16.mxu0 %v344
    %470 = vmatpush2.bf16.msra.mxu0 %v343
    %471 = vmatprep.subr.bf16.mxu0 %v342
    %472 = vmatpush2.bf16.msra.mxu0 %v341
    %473 = vmatprep.subr.bf16.mxu0 %v340
    %474 = vmatpush2.bf16.msra.mxu0 %v339
    %475 = vmatprep.subr.bf16.mxu0 %v338
    %476 = vmatpush2.bf16.msra.mxu0 %v337
    %477 = vmatprep.subr.bf16.mxu0 %v336
    %478 = vmatpush2.bf16.msra.mxu0 %v335
    %479 = vmatprep.mubr.bf16.mxu0 %v120
    %480 = vmatmul.mubr.bf16.gmra.mxu0 %v119
    %v481 = vpop.f32.mrf.mxu0
    %v482 = vadd.f32 %v106, %v481
    %v483 = vpop.f32.mrf.mxu0
    %v484 = vadd.f32 %v110, %v483
    %v485 = vpop.f32.mrf.mxu0
    %v486 = vpop.f32.mrf.mxu0
    %487 = vdwg.mxu0
    %488 = vmatprep.subr.bf16.mxu0 %v366
    %489 = vmatpush1.bf16.msra.mxu0 %v365
    %490 = vmatprep.subr.bf16.mxu0 %v364
    %491 = vmatpush1.bf16.msra.mxu0 %v363
    %492 = vmatprep.subr.bf16.mxu0 %v362
    %493 = vmatpush1.bf16.msra.mxu0 %v361
    %494 = vmatprep.subr.bf16.mxu0 %v360
    %495 = vmatpush1.bf16.msra.mxu0 %v359
    %496 = vmatprep.subr.bf16.mxu0 %v358
    %497 = vmatpush1.bf16.msra.mxu0 %v357
    %498 = vmatprep.subr.bf16.mxu0 %v356
    %499 = vmatpush1.bf16.msra.mxu0 %v355
    %500 = vmatprep.subr.bf16.mxu0 %v354
    %501 = vmatpush1.bf16.msra.mxu0 %v353
    %502 = vmatprep.subr.bf16.mxu0 %v352
    %503 = vmatpush1.bf16.msra.mxu0 %v351
    %504 = vmatprep.subr.bf16.mxu0 %v382
    %505 = vmatpush2.bf16.msra.mxu0 %v381
    %506 = vmatprep.subr.bf16.mxu0 %v380
    %507 = vmatpush2.bf16.msra.mxu0 %v379
    %508 = vmatprep.subr.bf16.mxu0 %v378
    %509 = vmatpush2.bf16.msra.mxu0 %v377
    %510 = vmatprep.subr.bf16.mxu0 %v376
    %511 = vmatpush2.bf16.msra.mxu0 %v375
    %512 = vmatprep.subr.bf16.mxu0 %v374
    %513 = vmatpush2.bf16.msra.mxu0 %v373
    %514 = vmatprep.subr.bf16.mxu0 %v372
    %515 = vmatpush2.bf16.msra.mxu0 %v371
    %516 = vmatprep.subr.bf16.mxu0 %v370
    %517 = vmatpush2.bf16.msra.mxu0 %v369
    %518 = vmatprep.subr.bf16.mxu0 %v368
    %519 = vmatpush2.bf16.msra.mxu0 %v367
    %520 = vmatprep.mubr.bf16.mxu0 %v122
    %521 = vmatmul.mubr.bf16.gmra.mxu0 %v121
    %v522 = vpop.f32.mrf.mxu0
    %v523 = vadd.f32 %v482, %v522
    %v524 = vpop.f32.mrf.mxu0
    %v525 = vadd.f32 %v484, %v524
    %v526 = vpop.f32.mrf.mxu0
    %v527 = vpop.f32.mrf.mxu0
    %528 = vdwg.mxu0
    %v529 = vmax.f32 %v523, 0.0
    %v530 = vmax.f32 %v525, 0.0
    %v531 = vpack.c.bf16 %v529, %v529
    %v532 = vpack.c.bf16 %v530, %v530
    %v533 = vld [vmem:[%s3] sm:$0xf]
    %v534 = vld [vmem:[%s3 + $0x4] sm:$0xf]
    %v535 = vld [vmem:[%s3 + $0x8] sm:$0xf]
    %v536 = vld [vmem:[%s3 + $0xc] sm:$0xf]
    %v537 = vld [vmem:[%s3 + $0x10] sm:$0xf]
    %v538 = vld [vmem:[%s3 + $0x14] sm:$0xf]
    %v539 = vld [vmem:[%s3 + $0x18] sm:$0xf]
    %v540 = vld [vmem:[%s3 + $0x1c] sm:$0xf]
    %v541 = vld [vmem:[%s3 + $0x20] sm:$0xf]
    %v542 = vld [vmem:[%s3 + $0x24] sm:$0xf]
    %v543 = vld [vmem:[%s3 + $0x28] sm:$0xf]
    %v544 = vld [vmem:[%s3 + $0x2c] sm:$0xf]
    %v545 = vld [vmem:[%s3 + $0x30] sm:$0xf]
    %v546 = vld [vmem:[%s3 + $0x34] sm:$0xf]
    %v547 = vld [vmem:[%s3 + $0x38] sm:$0xf]
    %v548 = vld [vmem:[%s3 + $0x3c] sm:$0xf]
    %v549 = vld [vmem:[%s3 + $0x40] sm:$0xf]
    %v550 = vld [vmem:[%s3 + $0x44] sm:$0xf]
    %v551 = vld [vmem:[%s3 + $0x48] sm:$0xf]
    %v552 = vld [vmem:[%s3 + $0x4c] sm:$0xf]
    %v553 = vld [vmem:[%s3 + $0x50] sm:$0xf]
    %v554 = vld [vmem:[%s3 + $0x54] sm:$0xf]
    %v555 = vld [vmem:[%s3 + $0x58] sm:$0xf]
    %v556 = vld [vmem:[%s3 + $0x5c] sm:$0xf]
    %v557 = vld [vmem:[%s3 + $0x60] sm:$0xf]
    %v558 = vld [vmem:[%s3 + $0x64] sm:$0xf]
    %v559 = vld [vmem:[%s3 + $0x68] sm:$0xf]
    %v560 = vld [vmem:[%s3 + $0x6c] sm:$0xf]
    %v561 = vld [vmem:[%s3 + $0x70] sm:$0xf]
    %v562 = vld [vmem:[%s3 + $0x74] sm:$0xf]
    %v563 = vld [vmem:[%s3 + $0x78] sm:$0xf]
    %v564 = vld [vmem:[%s3 + $0x7c] sm:$0xf]
    %v565 = vld [vmem:[%s4] sm:$0x1]
    %v567 = vlaneseq
    %v568 = vshrl.u32 %v567, 7
    %v569 = vsub.s32 0, %v568
    %v570 = vrot.slane %v565, %v569
    %v604 = vunpack.c.l.b16 %v533
    %v605 = vunpack.c.l.b16 %v534
    %v606 = vunpack.c.l.b16 %v535
    %v607 = vunpack.c.l.b16 %v536
    %v608 = vunpack.c.l.b16 %v537
    %v609 = vunpack.c.l.b16 %v538
    %v610 = vunpack.c.l.b16 %v539
    %v611 = vunpack.c.l.b16 %v540
    %v612 = vunpack.c.l.b16 %v541
    %v613 = vunpack.c.l.b16 %v542
    %v614 = vunpack.c.l.b16 %v543
    %v615 = vunpack.c.l.b16 %v544
    %v616 = vunpack.c.l.b16 %v545
    %v617 = vunpack.c.l.b16 %v546
    %v618 = vunpack.c.l.b16 %v547
    %v619 = vunpack.c.l.b16 %v548
    %v620 = vunpack.c.l.b16 %v549
    %v621 = vunpack.c.l.b16 %v550
    %v622 = vunpack.c.l.b16 %v551
    %v623 = vunpack.c.l.b16 %v552
    %v624 = vunpack.c.l.b16 %v553
    %v625 = vunpack.c.l.b16 %v554
    %v626 = vunpack.c.l.b16 %v555
    %v627 = vunpack.c.l.b16 %v556
    %v628 = vunpack.c.l.b16 %v557
    %v629 = vunpack.c.l.b16 %v558
    %v630 = vunpack.c.l.b16 %v559
    %v631 = vunpack.c.l.b16 %v560
    %v632 = vunpack.c.l.b16 %v561
    %v633 = vunpack.c.l.b16 %v562
    %v634 = vunpack.c.l.b16 %v563
    %v635 = vunpack.c.l.b16 %v564
    %v636 = vpack.c.b16 %v605, %v604
    %v637 = vpack.c.b16 %v607, %v606
    %v638 = vpack.c.b16 %v609, %v608
    %v639 = vpack.c.b16 %v611, %v610
    %v640 = vpack.c.b16 %v613, %v612
    %v641 = vpack.c.b16 %v615, %v614
    %v642 = vpack.c.b16 %v617, %v616
    %v643 = vpack.c.b16 %v619, %v618
    %v644 = vpack.c.b16 %v621, %v620
    %v645 = vpack.c.b16 %v623, %v622
    %v646 = vpack.c.b16 %v625, %v624
    %v647 = vpack.c.b16 %v627, %v626
    %v648 = vpack.c.b16 %v629, %v628
    %v649 = vpack.c.b16 %v631, %v630
    %v650 = vpack.c.b16 %v633, %v632
    %v651 = vpack.c.b16 %v635, %v634
    %668 = vmatprep.subr.bf16.mxu0 0
    %669 = vmatpush1.bf16.msra.mxu0 %v643
    %670 = vmatprep.subr.bf16.mxu0 0
    %671 = vmatpush1.bf16.msra.mxu0 %v642
    %672 = vmatprep.subr.bf16.mxu0 0
    %673 = vmatpush1.bf16.msra.mxu0 %v641
    %674 = vmatprep.subr.bf16.mxu0 0
    %675 = vmatpush1.bf16.msra.mxu0 %v640
    %676 = vmatprep.subr.bf16.mxu0 0
    %677 = vmatpush1.bf16.msra.mxu0 %v639
    %678 = vmatprep.subr.bf16.mxu0 0
    %679 = vmatpush1.bf16.msra.mxu0 %v638
    %680 = vmatprep.subr.bf16.mxu0 0
    %681 = vmatpush1.bf16.msra.mxu0 %v637
    %682 = vmatprep.subr.bf16.mxu0 0
    %683 = vmatpush1.bf16.msra.mxu0 %v636
    %684 = vmatprep.subr.bf16.mxu0 0
    %685 = vmatpush2.bf16.msra.mxu0 %v651
    %686 = vmatprep.subr.bf16.mxu0 0
    %687 = vmatpush2.bf16.msra.mxu0 %v650
    %688 = vmatprep.subr.bf16.mxu0 0
    %689 = vmatpush2.bf16.msra.mxu0 %v649
    %690 = vmatprep.subr.bf16.mxu0 0
    %691 = vmatpush2.bf16.msra.mxu0 %v648
    %692 = vmatprep.subr.bf16.mxu0 0
    %693 = vmatpush2.bf16.msra.mxu0 %v647
    %694 = vmatprep.subr.bf16.mxu0 0
    %695 = vmatpush2.bf16.msra.mxu0 %v646
    %696 = vmatprep.subr.bf16.mxu0 0
    %697 = vmatpush2.bf16.msra.mxu0 %v645
    %698 = vmatprep.subr.bf16.mxu0 0
    %699 = vmatpush2.bf16.msra.mxu0 %v644
    %700 = vmatprep.mubr.bf16.mxu0 %v532
    %701 = vmatmul.mubr.bf16.gmra.mxu0 %v531
    %v702 = vpop.f32.mrf.mxu0
    %v703 = vadd.f32 %v570, %v702
    %v704 = vpop.f32.mrf.mxu0
    %v705 = vpop.f32.mrf.mxu0
    %v706 = vpop.f32.mrf.mxu0
    %707 = vdwg.mxu0
    %v708 = vpack.c.bf16 %v703, %v703
    %vm709 = vcmask 11264
    %710 = vst.msk [vmem:[%s5] sm:$0xf] %vm709, %v708
    // Predicated region
    $region26: #{tpu_custom_call.1} parent=1 // pred_check
      _
    $region27: #{tpu_custom_call.1} parent=1 // pred_check_branch
      %712 = sbr.rel (0) target = $region29
    $region28: #{tpu_custom_call.1} parent=1 // pred_region
      _
    $region29: #{tpu_custom_call.1} parent=1 // pred_fallthru
      _
    // Predicated region
    $region30: #{tpu_custom_call.1} parent=1 // pred_check
      _
    $region31: #{tpu_custom_call.1} parent=1 // pred_check_branch
      %714 = sbr.rel (0) target = $region33
    $region32: #{tpu_custom_call.1} parent=1 // pred_region
      _
    $region33: #{tpu_custom_call.1} parent=1 // pred_fallthru
      _
    %715 = vsyncpa [#allocation3], 1

</llo_original>
